<compile_context>
chip_gen: v6e
topology: v6e:2x2x1
jax: 0.10.0
libtpu: 0.0.40
codegen_flags: <defaults>
</compile_context>

<pallas_src>
import functools

import jax
import jax.numpy as jnp
import numpy as np
from jax.experimental import pallas as pl
from jax.experimental.pallas import tpu as pltpu


def _round_up(n, m):
    return (n + m - 1) // m * m


def _tpu_is_v7x():
    try:
        kind = jax.devices()[0].device_kind.lower()
    except Exception:
        return False
    return ("v7" in kind) or ("tpu7" in kind)


def _choose_time_block(T, Bp, Ip, Hp, max_block_bytes=4 << 20):
    """Pick the time-block length TB.

    Targets an MXU-friendly matmul M dimension (TB*Bp >= 256) while keeping the
    (double-buffered) x / y tiles comfortably inside VMEM, preferring a divisor
    of T so the tail-masking path is not needed.  Awkward (e.g. prime) T no
    longer degrades to TB=1: the grid uses pl.cdiv and the kernel masks the
    trailing partial block.
    """
    tb = max(1, -(-256 // Bp))
    bytes_per_t = Bp * (Ip + Hp) * 4
    while tb > 1 and tb * bytes_per_t > max_block_bytes:
        tb = (tb + 1) // 2
    tb = min(tb, T)
    if T % tb:
        for cand in range(tb, 0, -1):
            if T % cand == 0 and cand * 2 >= tb:
                return cand
    return tb


def _choose_sub_block(TB, Bp, min_m=128):
    """Split the time block into sub-blocks whose projections are independent,
    so the MXU matmul of sub-block s+1 overlaps the serial VPU/EUP recurrence
    of sub-block s, while keeping each matmul's M = SB*Bp >= min_m."""
    if TB <= 1:
        return TB
    sb = min(TB, max(1, -(-min_m // Bp)))
    while TB % sb:
        sb -= 1
    if sb == TB and TB % 2 == 0 and (TB // 2) * Bp >= min_m:
        sb = TB // 2           # guarantee >=2 sub-blocks when M stays large
    return sb


# ----------------------------- Pallas kernel -------------------------------

def _brc_layer_kernel(x_ref, h0_ref, w_ref, b3_ref, wc_ref, wa_ref,
                      y_ref, hn_ref, h_scr, *, sub_block, seq_len, mask_tail):
    """One BRC layer.

    Grid = (n_hblk, n_tblk).  Axis 0 slices the hidden dimension ('parallel':
    legal because the BRC recurrence is diagonal in H); axis 1 iterates time
    blocks and MUST remain the innermost, 'arbitrary' grid axis -- the
    hidden-state carry in h_scr relies on that iteration order.

    Per-grid-step refs:
      x_ref  : (TB, Bp, Ip)   time block of inputs
      h0_ref : (Bp, HB)       initial hidden state (this H slice)
      w_ref  : (Ip, 3*HB)     fused [U_c^T | U_a^T | U_h^T] (f32 or bf16)
      b3_ref : (1, 3*HB)      fused [b_c | b_a | b_h]
      wc_ref : (1, HB)        diagonal recurrent weight w_c
      wa_ref : (1, HB)        diagonal recurrent weight w_a
      y_ref  : (TB, Bp, HB)   outputs for this time block
      hn_ref : (Bp, HB)       final hidden state (resident across time blocks)
      h_scr  : (Bp, HB)       VMEM scratch carrying the hidden state
    """
    ti = pl.program_id(1)
    TB, Bp, Ip = x_ref.shape
    HB = h0_ref.shape[1]
    SB = sub_block
    n_sub = TB // SB

    @pl.when(ti == 0)
    def _():
        h_scr[...] = h0_ref[...]

    # Hoisted once per grid step: JAX does not CSE broadcast_in_dim, so never
    # re-broadcast the (1,HB) vectors inside the latency-critical unrolled loop.
    wc = jnp.broadcast_to(wc_ref[...], (Bp, HB))
    wa = jnp.broadcast_to(wa_ref[...], (Bp, HB))
    b3 = b3_ref[...]          # (1, 3*HB)
    w = w_ref[...]            # (Ip, 3*HB), f32 or bf16

    h = h_scr[...]
    for s in range(n_sub):
        # One fused 3-gate projection per sub-block (MXU), biases folded in
        # here so they never appear in the serial per-timestep chain.  The
        # projections of different sub-blocks are data-independent, letting the
        # scheduler overlap sub-block s+1's matmul with sub-block s's gating.
        xs = x_ref[pl.ds(s * SB, SB)]                       # (SB, Bp, Ip)
        xs2d = xs.reshape(SB * Bp, Ip).astype(w.dtype)
        proj = jnp.dot(xs2d, w, preferred_element_type=jnp.float32) + b3
        proj = proj.reshape(SB, Bp, 3 * HB)

        # Pure elementwise (VPU/EUP) recurrence, fully unrolled, all in f32
        # (v5e has no bf16 VPU/EUP path).
        for t in range(SB):
            pt = proj[t]                                    # static slice
            xc = pt[:, 0:HB]
            xa = pt[:, HB:2 * HB]
            xh = pt[:, 2 * HB:3 * HB]
            # sigmoid(z) == 0.5*(1 + tanh(z/2)): one EUP op instead of exp+recip.
            c = 0.5 * (1.0 + jnp.tanh(0.5 * (xc + wc * h)))
            a = 1.0 + jnp.tanh(xa + wa * h)
            h_new = c * h + (1.0 - c) * jnp.tanh(xh + a * h)
            if mask_tail:
                # Only emitted when TB does not divide T: freeze h on the
                # padded trailing timesteps so hn is unaffected.
                valid = (ti * TB + s * SB + t) < seq_len
                h_new = jnp.where(valid, h_new, h)
            h = h_new
            y_ref[s * SB + t] = h                           # lane-dense store
    h_scr[...] = h

    @pl.when(ti == pl.num_programs(1) - 1)
    def _():
        hn_ref[...] = h


def _run_layer(x_p, h0_p, p):
    """Run one (already padded) BRC layer with a single pallas_call."""
    T, Bp, Ip = x_p.shape
    Hp, HB, n_hblk = p["Hp"], p["HB"], p["n_hblk"]
    assert Ip == p["Ip"]

    TB = _choose_time_block(T, Bp, Ip, Hp)
    SB = _choose_sub_block(TB, Bp)
    n_tblk = pl.cdiv(T, TB)
    mask_tail = (T % TB) != 0

    kernel = functools.partial(_brc_layer_kernel, sub_block=SB,
                               seq_len=T, mask_tail=mask_tail)

    vec_spec = lambda: pl.BlockSpec((1, HB), lambda hi, ti: (0, hi))
    grid_spec = pltpu.PrefetchScalarGridSpec(
        num_scalar_prefetch=0,
        grid=(n_hblk, n_tblk),
        in_specs=[
            pl.BlockSpec((TB, Bp, Ip), lambda hi, ti: (ti, 0, 0)),   # x block
            pl.BlockSpec((Bp, HB), lambda hi, ti: (0, hi)),          # h0 slice
            pl.BlockSpec((Ip, 3 * HB), lambda hi, ti: (0, hi)),      # fused W
            pl.BlockSpec((1, 3 * HB), lambda hi, ti: (0, hi)),       # fused b
            vec_spec(),                                              # w_c
            vec_spec(),                                              # w_a
        ],
        out_specs=[
            pl.BlockSpec((TB, Bp, HB), lambda hi, ti: (ti, 0, hi)),  # y block
            pl.BlockSpec((Bp, HB), lambda hi, ti: (0, hi)),          # hn
        ],
        scratch_shapes=[pltpu.VMEM((Bp, HB), jnp.float32)],
    )

    # Explicit scoped-VMEM budget: the 16 MiB (v5e) / 32 MiB (v6e, v7x)
    # defaults would otherwise cap the block sizes; keep headroom on v7x's
    # 64 MiB physical VMEM.
    w_bytes = Ip * 3 * HB * p["W"].dtype.itemsize
    blk_bytes = (TB * Bp * Ip * 4 + TB * Bp * HB * 4 + w_bytes
                 + 5 * HB * 4 + 2 * Bp * HB * 4)
    needed = 2 * blk_bytes + Bp * HB * 4 + (4 << 20)
    cap = (56 << 20) if p["is_v7x"] else (100 << 20)
    vmem_limit = int(min(cap, max(needed, 32 << 20)))

    y_p, hn_p = pl.pallas_call(
        kernel,
        out_shape=(
            jax.ShapeDtypeStruct((T, Bp, Hp), jnp.float32),
            jax.ShapeDtypeStruct((Bp, Hp), jnp.float32),
        ),
        grid_spec=grid_spec,
        compiler_params=pltpu.CompilerParams(
            dimension_semantics=("parallel", "arbitrary"),
            vmem_limit_bytes=vmem_limit),
    )(x_p, h0_p, p["W"], p["b3"], p["wc"], p["wa"])
    return y_p, hn_p


# --------------------------- Parameter handling -----------------------------

def _xavier_uniform(key, shape):
    fan_out, fan_in = shape
    bound = float(np.sqrt(6.0 / (fan_in + fan_out)))
    return jax.random.uniform(key, shape, jnp.float32, -bound, bound)


def init_brc_params(key, input_size, hidden_size, num_layers):
    """Deterministic parameter init mirroring BRCLayer.__init__ shapes."""
    layers = []
    in_sz = input_size
    for _ in range(num_layers):
        keys = jax.random.split(key, 9)
        key = keys[0]
        p = {
            "U_c": _xavier_uniform(keys[1], (hidden_size, in_sz)),
            "w_c": jax.random.normal(keys[2], (hidden_size,), jnp.float32),
            "b_c": jax.random.normal(keys[3], (hidden_size,), jnp.float32),
            "U_a": _xavier_uniform(keys[4], (hidden_size, in_sz)),
            "w_a": jax.random.normal(keys[5], (hidden_size,), jnp.float32),
            "b_a": jax.random.normal(keys[6], (hidden_size,), jnp.float32),
            "U_h": _xavier_uniform(keys[7], (hidden_size, in_sz)),
            "b_h": jax.random.normal(keys[8], (hidden_size,), jnp.float32),
        }
        layers.append(p)
        in_sz = hidden_size
    return layers


def prepare_brc_params(layer_params, input_size, hidden_size,
                       matmul_dtype=jnp.float32):
    """One-time preprocessing (off the timing path): transpose, zero-pad to
    lane/sublane-friendly shapes, concatenate U_c/U_a/U_h into one
    (Ip, 3*HB)-per-H-block weight slab (optionally stored in bf16 for the MXU),
    and fuse b_c/b_a/b_h into a matching (1, 3*HB) bias slab so the bias adds
    leave the serial per-timestep gating chain."""
    H = hidden_size
    Hp = _round_up(H, 128)
    is_v7x = _tpu_is_v7x()
    # H-splitting only pays on the 2-TensorCore v7x (second core gets its own
    # slice); on single-core v5e/v6e it just doubles grid steps and x DMA.
    n_hblk = 2 if (is_v7x and Hp % 256 == 0) else 1
    HB = Hp // n_hblk

    prepped = []
    in_sz = input_size
    for p in layer_params:
        Ip = _round_up(in_sz, 128)

        def prep_U(U):                      # (H, in_sz) -> padded (Ip, Hp)
            UT = U.T
            return jnp.pad(UT, ((0, Ip - in_sz), (0, Hp - H)))

        UcT, UaT, UhT = prep_U(p["U_c"]), prep_U(p["U_a"]), prep_U(p["U_h"])
        # Per H-block layout: block hi owns cols [Uc_hi | Ua_hi | Uh_hi].
        W = jnp.stack(
            [UcT.reshape(Ip, n_hblk, HB),
             UaT.reshape(Ip, n_hblk, HB),
             UhT.reshape(Ip, n_hblk, HB)], axis=2
        ).reshape(Ip, n_hblk * 3 * HB).astype(matmul_dtype)

        padv = lambda v: jnp.pad(v, (0, Hp - H))
        b3 = jnp.stack(
            [padv(p["b_c"]).reshape(n_hblk, HB),
             padv(p["b_a"]).reshape(n_hblk, HB),
             padv(p["b_h"]).reshape(n_hblk, HB)], axis=1
        ).reshape(1, n_hblk * 3 * HB)

        prepped.append({
            "W": W, "b3": b3,
            "wc": padv(p["w_c"]).reshape(1, Hp),
            "wa": padv(p["w_a"]).reshape(1, Hp),
            "Ip": Ip, "Hp": Hp, "HB": HB, "n_hblk": n_hblk, "H": H,
            "is_v7x": is_v7x,
        })
        in_sz = H
    return prepped


# ------------------------------ BRC forward --------------------------------

def brc_forward(prepped_layers, x_seq, h0=None):
    """Stacked BRC forward (neuromodulated=False, train_h0=False).

    x_seq: (T, B, input_size) float32
    h0   : optional (num_layers, B, H); defaults to zeros.
    Returns (output (T, B, H), hn (num_layers, B, H)).
    """
    num_layers = len(prepped_layers)
    T, B, I = x_seq.shape
    H = prepped_layers[0]["H"]
    Hp = prepped_layers[0]["Hp"]
    Ip0 = prepped_layers[0]["Ip"]
    Bp = _round_up(B, 8)

    # Zero-pad once; padded lanes/sublanes stay exactly zero / are sliced off,
    # so semantics are unchanged.
    x_p = jnp.pad(x_seq.astype(jnp.float32),
                  ((0, 0), (0, Bp - B), (0, Ip0 - I)))
    if h0 is None:
        h0_p = jnp.zeros((num_layers, Bp, Hp), jnp.float32)
    else:
        h0_p = jnp.pad(h0.astype(jnp.float32),
                       ((0, 0), (0, Bp - B), (0, Hp - H)))

    hn_list = []
    for l, p in enumerate(prepped_layers):
        x_p, hn_p = _run_layer(x_p, h0_p[l], p)
        hn_list.append(hn_p[:B, :H])
    return x_p[:, :B, :H], jnp.stack(hn_list, axis=0)


# ---------------------------- Pure-JAX reference ---------------------------

def _brc_layer_ref(x_seq, h0, p):
    def step(h, x):
        c = jax.nn.sigmoid(x @ p["U_c"].T + p["w_c"] * h + p["b_c"])
        a = 1.0 + jnp.tanh(x @ p["U_a"].T + p["w_a"] * h + p["b_a"])
        h = c * h + (1.0 - c) * jnp.tanh(x @ p["U_h"].T + a * h + p["b_h"])
        return h, h
    hn, ys = jax.lax.scan(step, h0, x_seq)
    return ys, hn


def brc_forward_ref(layer_params, x_seq, h0=None):
    num_layers = len(layer_params)
    T, B, _ = x_seq.shape
    H = layer_params[0]["w_c"].shape[0]
    if h0 is None:
        h0 = jnp.zeros((num_layers, B, H), jnp.float32)
    hn_list = []
    for l, p in enumerate(layer_params):
        x_seq, hnl = _brc_layer_ref(x_seq, h0[l], p)
        hn_list.append(hnl)
    return x_seq, jnp.stack(hn_list, axis=0)


# --------------------------------- main -------------------------------------

if __name__ == "__main__":
    seq_len, batch, input_size, hidden_size, num_layers = 8, 2, 4, 32, 2

    key = jax.random.PRNGKey(0)
    k_params, k_x = jax.random.split(key)
    params = init_brc_params(k_params, input_size, hidden_size, num_layers)
    x_seq = jax.random.normal(k_x, (seq_len, batch, input_size), jnp.float32)

    # f32 path: bit-accurate enough to match the f32 reference at 1e-5.
    prepped = prepare_brc_params(params, input_size, hidden_size)
    y_seq, hn = brc_forward(prepped, x_seq)
    y_seq = jax.block_until_ready(y_seq)
    hn = jax.block_until_ready(hn)

    y_ref, hn_ref = brc_forward_ref(params, x_seq)
    np.testing.assert_allclose(np.asarray(y_seq), np.asarray(y_ref),
                               rtol=1e-5, atol=1e-5)
    np.testing.assert_allclose(np.asarray(hn), np.asarray(hn_ref),
                               rtol=1e-5, atol=1e-5)

    # bf16-weight MXU path (the production-speed config on v5e/v6e/v7x): smoke
    # test that it compiles/runs and stays in the same ballpark (bf16 breaks
    # the 1e-5 budget by design, so only a loose sanity check here).
    prepped_bf16 = prepare_brc_params(params, input_size, hidden_size,
                                      matmul_dtype=jnp.bfloat16)
    y_bf16, hn_bf16 = brc_forward(prepped_bf16, x_seq)
    y_bf16 = jax.block_until_ready(y_bf16)
    hn_bf16 = jax.block_until_ready(hn_bf16)
    assert bool(jnp.all(jnp.isfinite(y_bf16))) and bool(jnp.all(jnp.isfinite(hn_bf16)))
    np.testing.assert_allclose(np.asarray(y_bf16), np.asarray(y_ref),
                               rtol=0.0, atol=0.25)

    assert y_seq.shape == (seq_len, batch, hidden_size)
    assert hn.shape == (num_layers, batch, hidden_size)
    print("KERNEL_OK")
</pallas_src>

<mosaic_0001>
module attributes {stable_mosaic.version = 11 : i64} {
  func.func @_brc_layer_kernel(%arg0: i32, %arg1: i32, %arg2: memref<8x8x128xf32, #tpu.memory_space<vmem>>, %arg3: memref<8x128xf32, #tpu.memory_space<vmem>>, %arg4: memref<128x384xf32, #tpu.memory_space<vmem>>, %arg5: memref<1x384xf32, #tpu.memory_space<vmem>>, %arg6: memref<1x128xf32, #tpu.memory_space<vmem>>, %arg7: memref<1x128xf32, #tpu.memory_space<vmem>>, %arg8: memref<8x8x128xf32, #tpu.memory_space<vmem>>, %arg9: memref<8x128xf32, #tpu.memory_space<vmem>>, %arg10: memref<8x128xf32, #tpu.memory_space<vmem>>) attributes {dimension_semantics = [#tpu.dimension_semantics<parallel>, #tpu.dimension_semantics<arbitrary>], iteration_bounds = array<i64: 1, 1>, scalar_prefetch = 0 : i64, scratch_operands = 1 : i64, tpu.core_type = #tpu.core_type<tc>, window_params = [{transform_indices = @transform_0, window_bounds = array<i64: 8, 8, 128>}, {transform_indices = @transform_1, window_bounds = array<i64: 8, 128>}, {transform_indices = @transform_2, window_bounds = array<i64: 128, 384>}, {transform_indices = @transform_3, window_bounds = array<i64: 1, 384>}, {transform_indices = @transform_4, window_bounds = array<i64: 1, 128>}, {transform_indices = @transform_5, window_bounds = array<i64: 1, 128>}, {transform_indices = @transform_6, window_bounds = array<i64: 8, 8, 128>}, {transform_indices = @transform_7, window_bounds = array<i64: 8, 128>}]} {
    %c0_i32 = arith.constant 0 : i32
    %0 = arith.cmpi eq, %arg1, %c0_i32 : i32
    %1 = arith.extui %0 : i1 to i32
    %c0_i32_0 = arith.constant 0 : i32
    %2 = arith.cmpi ne, %1, %c0_i32_0 : i32
    scf.if %2 {
      %c0_74 = arith.constant 0 : index
      %c0_75 = arith.constant 0 : index
      %262 = vector.load %arg3[%c0_74, %c0_75] : memref<8x128xf32, #tpu.memory_space<vmem>>, vector<8x128xf32>
      %c0_76 = arith.constant 0 : index
      %c0_77 = arith.constant 0 : index
      %263 = vector.load %arg10[%c0_76, %c0_77] : memref<8x128xf32, #tpu.memory_space<vmem>>, vector<8x128xf32>
      tpu.vector_store %arg10[%c0_76, %c0_77], %262 {strides = array<i32>} : memref<8x128xf32, #tpu.memory_space<vmem>>, vector<8x128xf32>,
    } else {
    }
    %c0 = arith.constant 0 : index
    %c0_1 = arith.constant 0 : index
    %3 = vector.load %arg6[%c0, %c0_1] : memref<1x128xf32, #tpu.memory_space<vmem>>, vector<1x128xf32>
    %4 = vector.shape_cast %3 : vector<1x128xf32> to vector<1x128xf32>
    %5 = vector.broadcast %4 : vector<1x128xf32> to vector<8x128xf32>
    %c0_2 = arith.constant 0 : index
    %c0_3 = arith.constant 0 : index
    %6 = vector.load %arg7[%c0_2, %c0_3] : memref<1x128xf32, #tpu.memory_space<vmem>>, vector<1x128xf32>
    %7 = vector.shape_cast %6 : vector<1x128xf32> to vector<1x128xf32>
    %8 = vector.broadcast %7 : vector<1x128xf32> to vector<8x128xf32>
    %c0_4 = arith.constant 0 : index
    %c0_5 = arith.constant 0 : index
    %9 = vector.load %arg5[%c0_4, %c0_5] : memref<1x384xf32, #tpu.memory_space<vmem>>, vector<1x384xf32>
    %c0_6 = arith.constant 0 : index
    %c0_7 = arith.constant 0 : index
    %10 = vector.load %arg4[%c0_6, %c0_7] : memref<128x384xf32, #tpu.memory_space<vmem>>, vector<128x384xf32>
    %c0_8 = arith.constant 0 : index
    %c0_9 = arith.constant 0 : index
    %11 = vector.load %arg10[%c0_8, %c0_9] : memref<8x128xf32, #tpu.memory_space<vmem>>, vector<8x128xf32>
    %c0_10 = arith.constant 0 : index
    %c0_11 = arith.constant 0 : index
    %c0_12 = arith.constant 0 : index
    %12 = vector.load %arg2[%c0_10, %c0_11, %c0_12] : memref<8x8x128xf32, #tpu.memory_space<vmem>>, vector<8x8x128xf32>
    %13 = vector.shape_cast %12 : vector<8x8x128xf32> to vector<64x128xf32>
    %cst = arith.constant dense<0.000000e+00> : vector<64x384xf32>
    %14 = tpu.matmul %13, %10, %cst {dimension_numbers = #tpu.dot_dimension_numbers<[1], [0], [0], [1], [0, 0, 1, 1], [], []>} : vector<64x128xf32>, vector<128x384xf32>, vector<64x384xf32> -> vector<64x384xf32>
    %15 = vector.broadcast %9 : vector<1x384xf32> to vector<64x384xf32>
    %16 = arith.addf %14, %15 : vector<64x384xf32>
    %17 = vector.shape_cast %16 : vector<64x384xf32> to vector<8x8x384xf32>
    %18 = vector.extract_strided_slice %17 {offsets = [0, 0, 0], sizes = [1, 8, 384], strides = [1, 1, 1]} : vector<8x8x384xf32> to vector<1x8x384xf32>
    %19 = vector.shape_cast %18 : vector<1x8x384xf32> to vector<8x384xf32>
    %20 = vector.extract_strided_slice %19 {offsets = [0, 0], sizes = [8, 128], strides = [1, 1]} : vector<8x384xf32> to vector<8x128xf32>
    %21 = vector.extract_strided_slice %19 {offsets = [0, 128], sizes = [8, 128], strides = [1, 1]} : vector<8x384xf32> to vector<8x128xf32>
    %22 = vector.extract_strided_slice %19 {offsets = [0, 256], sizes = [8, 128], strides = [1, 1]} : vector<8x384xf32> to vector<8x128xf32>
    %23 = arith.mulf %5, %11 : vector<8x128xf32>
    %24 = arith.addf %20, %23 : vector<8x128xf32>
    %cst_13 = arith.constant 5.000000e-01 : f32
    %25 = vector.broadcast %cst_13 : f32 to vector<8x128xf32>
    %26 = arith.mulf %25, %24 : vector<8x128xf32>
    %27 = math.tanh %26 : vector<8x128xf32>
    %cst_14 = arith.constant 1.000000e+00 : f32
    %28 = vector.broadcast %cst_14 : f32 to vector<8x128xf32>
    %29 = arith.addf %28, %27 : vector<8x128xf32>
    %cst_15 = arith.constant 5.000000e-01 : f32
    %30 = vector.broadcast %cst_15 : f32 to vector<8x128xf32>
    %31 = arith.mulf %30, %29 : vector<8x128xf32>
    %32 = arith.mulf %8, %11 : vector<8x128xf32>
    %33 = arith.addf %21, %32 : vector<8x128xf32>
    %34 = math.tanh %33 : vector<8x128xf32>
    %cst_16 = arith.constant 1.000000e+00 : f32
    %35 = vector.broadcast %cst_16 : f32 to vector<8x128xf32>
    %36 = arith.addf %35, %34 : vector<8x128xf32>
    %37 = arith.mulf %31, %11 : vector<8x128xf32>
    %cst_17 = arith.constant 1.000000e+00 : f32
    %38 = vector.broadcast %cst_17 : f32 to vector<8x128xf32>
    %39 = arith.subf %38, %31 : vector<8x128xf32>
    %40 = arith.mulf %36, %11 : vector<8x128xf32>
    %41 = arith.addf %22, %40 : vector<8x128xf32>
    %42 = math.tanh %41 : vector<8x128xf32>
    %43 = arith.mulf %39, %42 : vector<8x128xf32>
    %44 = arith.addf %37, %43 : vector<8x128xf32>
    %c0_18 = arith.constant 0 : index
    %c0_19 = arith.constant 0 : index
    %c0_20 = arith.constant 0 : index
    %45 = vector.load %arg8[%c0_18, %c0_19, %c0_20] : memref<8x8x128xf32, #tpu.memory_space<vmem>>, vector<1x8x128xf32>
    %46 = vector.shape_cast %45 : vector<1x8x128xf32> to vector<8x128xf32>
    %47 = vector.shape_cast %44 : vector<8x128xf32> to vector<1x8x128xf32>
    tpu.vector_store %arg8[%c0_18, %c0_19, %c0_20], %47 {strides = array<i32>} : memref<8x8x128xf32, #tpu.memory_space<vmem>>, vector<1x8x128xf32>,
    %48 = vector.extract_strided_slice %17 {offsets = [1, 0, 0], sizes = [1, 8, 384], strides = [1, 1, 1]} : vector<8x8x384xf32> to vector<1x8x384xf32>
    %49 = vector.shape_cast %48 : vector<1x8x384xf32> to vector<8x384xf32>
    %50 = vector.extract_strided_slice %49 {offsets = [0, 0], sizes = [8, 128], strides = [1, 1]} : vector<8x384xf32> to vector<8x128xf32>
    %51 = vector.extract_strided_slice %49 {offsets = [0, 128], sizes = [8, 128], strides = [1, 1]} : vector<8x384xf32> to vector<8x128xf32>
    %52 = vector.extract_strided_slice %49 {offsets = [0, 256], sizes = [8, 128], strides = [1, 1]} : vector<8x384xf32> to vector<8x128xf32>
    %53 = arith.mulf %5, %44 : vector<8x128xf32>
    %54 = arith.addf %50, %53 : vector<8x128xf32>
    %cst_21 = arith.constant 5.000000e-01 : f32
    %55 = vector.broadcast %cst_21 : f32 to vector<8x128xf32>
    %56 = arith.mulf %55, %54 : vector<8x128xf32>
    %57 = math.tanh %56 : vector<8x128xf32>
    %cst_22 = arith.constant 1.000000e+00 : f32
    %58 = vector.broadcast %cst_22 : f32 to vector<8x128xf32>
    %59 = arith.addf %58, %57 : vector<8x128xf32>
    %cst_23 = arith.constant 5.000000e-01 : f32
    %60 = vector.broadcast %cst_23 : f32 to vector<8x128xf32>
    %61 = arith.mulf %60, %59 : vector<8x128xf32>
    %62 = arith.mulf %8, %44 : vector<8x128xf32>
    %63 = arith.addf %51, %62 : vector<8x128xf32>
    %64 = math.tanh %63 : vector<8x128xf32>
    %cst_24 = arith.constant 1.000000e+00 : f32
    %65 = vector.broadcast %cst_24 : f32 to vector<8x128xf32>
    %66 = arith.addf %65, %64 : vector<8x128xf32>
    %67 = arith.mulf %61, %44 : vector<8x128xf32>
    %cst_25 = arith.constant 1.000000e+00 : f32
    %68 = vector.broadcast %cst_25 : f32 to vector<8x128xf32>
    %69 = arith.subf %68, %61 : vector<8x128xf32>
    %70 = arith.mulf %66, %44 : vector<8x128xf32>
    %71 = arith.addf %52, %70 : vector<8x128xf32>
    %72 = math.tanh %71 : vector<8x128xf32>
    %73 = arith.mulf %69, %72 : vector<8x128xf32>
    %74 = arith.addf %67, %73 : vector<8x128xf32>
    %c1 = arith.constant 1 : index
    %c0_26 = arith.constant 0 : index
    %c0_27 = arith.constant 0 : index
    %75 = vector.load %arg8[%c1, %c0_26, %c0_27] : memref<8x8x128xf32, #tpu.memory_space<vmem>>, vector<1x8x128xf32>
    %76 = vector.shape_cast %75 : vector<1x8x128xf32> to vector<8x128xf32>
    %77 = vector.shape_cast %74 : vector<8x128xf32> to vector<1x8x128xf32>
    tpu.vector_store %arg8[%c1, %c0_26, %c0_27], %77 {strides = array<i32>} : memref<8x8x128xf32, #tpu.memory_space<vmem>>, vector<1x8x128xf32>,
    %78 = vector.extract_strided_slice %17 {offsets = [2, 0, 0], sizes = [1, 8, 384], strides = [1, 1, 1]} : vector<8x8x384xf32> to vector<1x8x384xf32>
    %79 = vector.shape_cast %78 : vector<1x8x384xf32> to vector<8x384xf32>
    %80 = vector.extract_strided_slice %79 {offsets = [0, 0], sizes = [8, 128], strides = [1, 1]} : vector<8x384xf32> to vector<8x128xf32>
    %81 = vector.extract_strided_slice %79 {offsets = [0, 128], sizes = [8, 128], strides = [1, 1]} : vector<8x384xf32> to vector<8x128xf32>
    %82 = vector.extract_strided_slice %79 {offsets = [0, 256], sizes = [8, 128], strides = [1, 1]} : vector<8x384xf32> to vector<8x128xf32>
    %83 = arith.mulf %5, %74 : vector<8x128xf32>
    %84 = arith.addf %80, %83 : vector<8x128xf32>
    %cst_28 = arith.constant 5.000000e-01 : f32
    %85 = vector.broadcast %cst_28 : f32 to vector<8x128xf32>
    %86 = arith.mulf %85, %84 : vector<8x128xf32>
    %87 = math.tanh %86 : vector<8x128xf32>
    %cst_29 = arith.constant 1.000000e+00 : f32
    %88 = vector.broadcast %cst_29 : f32 to vector<8x128xf32>
    %89 = arith.addf %88, %87 : vector<8x128xf32>
    %cst_30 = arith.constant 5.000000e-01 : f32
    %90 = vector.broadcast %cst_30 : f32 to vector<8x128xf32>
    %91 = arith.mulf %90, %89 : vector<8x128xf32>
    %92 = arith.mulf %8, %74 : vector<8x128xf32>
    %93 = arith.addf %81, %92 : vector<8x128xf32>
    %94 = math.tanh %93 : vector<8x128xf32>
    %cst_31 = arith.constant 1.000000e+00 : f32
    %95 = vector.broadcast %cst_31 : f32 to vector<8x128xf32>
    %96 = arith.addf %95, %94 : vector<8x128xf32>
    %97 = arith.mulf %91, %74 : vector<8x128xf32>
    %cst_32 = arith.constant 1.000000e+00 : f32
    %98 = vector.broadcast %cst_32 : f32 to vector<8x128xf32>
    %99 = arith.subf %98, %91 : vector<8x128xf32>
    %100 = arith.mulf %96, %74 : vector<8x128xf32>
    %101 = arith.addf %82, %100 : vector<8x128xf32>
    %102 = math.tanh %101 : vector<8x128xf32>
    %103 = arith.mulf %99, %102 : vector<8x128xf32>
    %104 = arith.addf %97, %103 : vector<8x128xf32>
    %c2 = arith.constant 2 : index
    %c0_33 = arith.constant 0 : index
    %c0_34 = arith.constant 0 : index
    %105 = vector.load %arg8[%c2, %c0_33, %c0_34] : memref<8x8x128xf32, #tpu.memory_space<vmem>>, vector<1x8x128xf32>
    %106 = vector.shape_cast %105 : vector<1x8x128xf32> to vector<8x128xf32>
    %107 = vector.shape_cast %104 : vector<8x128xf32> to vector<1x8x128xf32>
    tpu.vector_store %arg8[%c2, %c0_33, %c0_34], %107 {strides = array<i32>} : memref<8x8x128xf32, #tpu.memory_space<vmem>>, vector<1x8x128xf32>,
    %108 = vector.extract_strided_slice %17 {offsets = [3, 0, 0], sizes = [1, 8, 384], strides = [1, 1, 1]} : vector<8x8x384xf32> to vector<1x8x384xf32>
    %109 = vector.shape_cast %108 : vector<1x8x384xf32> to vector<8x384xf32>
    %110 = vector.extract_strided_slice %109 {offsets = [0, 0], sizes = [8, 128], strides = [1, 1]} : vector<8x384xf32> to vector<8x128xf32>
    %111 = vector.extract_strided_slice %109 {offsets = [0, 128], sizes = [8, 128], strides = [1, 1]} : vector<8x384xf32> to vector<8x128xf32>
    %112 = vector.extract_strided_slice %109 {offsets = [0, 256], sizes = [8, 128], strides = [1, 1]} : vector<8x384xf32> to vector<8x128xf32>
    %113 = arith.mulf %5, %104 : vector<8x128xf32>
    %114 = arith.addf %110, %113 : vector<8x128xf32>
    %cst_35 = arith.constant 5.000000e-01 : f32
    %115 = vector.broadcast %cst_35 : f32 to vector<8x128xf32>
    %116 = arith.mulf %115, %114 : vector<8x128xf32>
    %117 = math.tanh %116 : vector<8x128xf32>
    %cst_36 = arith.constant 1.000000e+00 : f32
    %118 = vector.broadcast %cst_36 : f32 to vector<8x128xf32>
    %119 = arith.addf %118, %117 : vector<8x128xf32>
    %cst_37 = arith.constant 5.000000e-01 : f32
    %120 = vector.broadcast %cst_37 : f32 to vector<8x128xf32>
    %121 = arith.mulf %120, %119 : vector<8x128xf32>
    %122 = arith.mulf %8, %104 : vector<8x128xf32>
    %123 = arith.addf %111, %122 : vector<8x128xf32>
    %124 = math.tanh %123 : vector<8x128xf32>
    %cst_38 = arith.constant 1.000000e+00 : f32
    %125 = vector.broadcast %cst_38 : f32 to vector<8x128xf32>
    %126 = arith.addf %125, %124 : vector<8x128xf32>
    %127 = arith.mulf %121, %104 : vector<8x128xf32>
    %cst_39 = arith.constant 1.000000e+00 : f32
    %128 = vector.broadcast %cst_39 : f32 to vector<8x128xf32>
    %129 = arith.subf %128, %121 : vector<8x128xf32>
    %130 = arith.mulf %126, %104 : vector<8x128xf32>
    %131 = arith.addf %112, %130 : vector<8x128xf32>
    %132 = math.tanh %131 : vector<8x128xf32>
    %133 = arith.mulf %129, %132 : vector<8x128xf32>
    %134 = arith.addf %127, %133 : vector<8x128xf32>
    %c3 = arith.constant 3 : index
    %c0_40 = arith.constant 0 : index
    %c0_41 = arith.constant 0 : index
    %135 = vector.load %arg8[%c3, %c0_40, %c0_41] : memref<8x8x128xf32, #tpu.memory_space<vmem>>, vector<1x8x128xf32>
    %136 = vector.shape_cast %135 : vector<1x8x128xf32> to vector<8x128xf32>
    %137 = vector.shape_cast %134 : vector<8x128xf32> to vector<1x8x128xf32>
    tpu.vector_store %arg8[%c3, %c0_40, %c0_41], %137 {strides = array<i32>} : memref<8x8x128xf32, #tpu.memory_space<vmem>>, vector<1x8x128xf32>,
    %138 = vector.extract_strided_slice %17 {offsets = [4, 0, 0], sizes = [1, 8, 384], strides = [1, 1, 1]} : vector<8x8x384xf32> to vector<1x8x384xf32>
    %139 = vector.shape_cast %138 : vector<1x8x384xf32> to vector<8x384xf32>
    %140 = vector.extract_strided_slice %139 {offsets = [0, 0], sizes = [8, 128], strides = [1, 1]} : vector<8x384xf32> to vector<8x128xf32>
    %141 = vector.extract_strided_slice %139 {offsets = [0, 128], sizes = [8, 128], strides = [1, 1]} : vector<8x384xf32> to vector<8x128xf32>
    %142 = vector.extract_strided_slice %139 {offsets = [0, 256], sizes = [8, 128], strides = [1, 1]} : vector<8x384xf32> to vector<8x128xf32>
    %143 = arith.mulf %5, %134 : vector<8x128xf32>
    %144 = arith.addf %140, %143 : vector<8x128xf32>
    %cst_42 = arith.constant 5.000000e-01 : f32
    %145 = vector.broadcast %cst_42 : f32 to vector<8x128xf32>
    %146 = arith.mulf %145, %144 : vector<8x128xf32>
    %147 = math.tanh %146 : vector<8x128xf32>
    %cst_43 = arith.constant 1.000000e+00 : f32
    %148 = vector.broadcast %cst_43 : f32 to vector<8x128xf32>
    %149 = arith.addf %148, %147 : vector<8x128xf32>
    %cst_44 = arith.constant 5.000000e-01 : f32
    %150 = vector.broadcast %cst_44 : f32 to vector<8x128xf32>
    %151 = arith.mulf %150, %149 : vector<8x128xf32>
    %152 = arith.mulf %8, %134 : vector<8x128xf32>
    %153 = arith.addf %141, %152 : vector<8x128xf32>
    %154 = math.tanh %153 : vector<8x128xf32>
    %cst_45 = arith.constant 1.000000e+00 : f32
    %155 = vector.broadcast %cst_45 : f32 to vector<8x128xf32>
    %156 = arith.addf %155, %154 : vector<8x128xf32>
    %157 = arith.mulf %151, %134 : vector<8x128xf32>
    %cst_46 = arith.constant 1.000000e+00 : f32
    %158 = vector.broadcast %cst_46 : f32 to vector<8x128xf32>
    %159 = arith.subf %158, %151 : vector<8x128xf32>
    %160 = arith.mulf %156, %134 : vector<8x128xf32>
    %161 = arith.addf %142, %160 : vector<8x128xf32>
    %162 = math.tanh %161 : vector<8x128xf32>
    %163 = arith.mulf %159, %162 : vector<8x128xf32>
    %164 = arith.addf %157, %163 : vector<8x128xf32>
    %c4 = arith.constant 4 : index
    %c0_47 = arith.constant 0 : index
    %c0_48 = arith.constant 0 : index
    %165 = vector.load %arg8[%c4, %c0_47, %c0_48] : memref<8x8x128xf32, #tpu.memory_space<vmem>>, vector<1x8x128xf32>
    %166 = vector.shape_cast %165 : vector<1x8x128xf32> to vector<8x128xf32>
    %167 = vector.shape_cast %164 : vector<8x128xf32> to vector<1x8x128xf32>
    tpu.vector_store %arg8[%c4, %c0_47, %c0_48], %167 {strides = array<i32>} : memref<8x8x128xf32, #tpu.memory_space<vmem>>, vector<1x8x128xf32>,
    %168 = vector.extract_strided_slice %17 {offsets = [5, 0, 0], sizes = [1, 8, 384], strides = [1, 1, 1]} : vector<8x8x384xf32> to vector<1x8x384xf32>
    %169 = vector.shape_cast %168 : vector<1x8x384xf32> to vector<8x384xf32>
    %170 = vector.extract_strided_slice %169 {offsets = [0, 0], sizes = [8, 128], strides = [1, 1]} : vector<8x384xf32> to vector<8x128xf32>
    %171 = vector.extract_strided_slice %169 {offsets = [0, 128], sizes = [8, 128], strides = [1, 1]} : vector<8x384xf32> to vector<8x128xf32>
    %172 = vector.extract_strided_slice %169 {offsets = [0, 256], sizes = [8, 128], strides = [1, 1]} : vector<8x384xf32> to vector<8x128xf32>
    %173 = arith.mulf %5, %164 : vector<8x128xf32>
    %174 = arith.addf %170, %173 : vector<8x128xf32>
    %cst_49 = arith.constant 5.000000e-01 : f32
    %175 = vector.broadcast %cst_49 : f32 to vector<8x128xf32>
    %176 = arith.mulf %175, %174 : vector<8x128xf32>
    %177 = math.tanh %176 : vector<8x128xf32>
    %cst_50 = arith.constant 1.000000e+00 : f32
    %178 = vector.broadcast %cst_50 : f32 to vector<8x128xf32>
    %179 = arith.addf %178, %177 : vector<8x128xf32>
    %cst_51 = arith.constant 5.000000e-01 : f32
    %180 = vector.broadcast %cst_51 : f32 to vector<8x128xf32>
    %181 = arith.mulf %180, %179 : vector<8x128xf32>
    %182 = arith.mulf %8, %164 : vector<8x128xf32>
    %183 = arith.addf %171, %182 : vector<8x128xf32>
    %184 = math.tanh %183 : vector<8x128xf32>
    %cst_52 = arith.constant 1.000000e+00 : f32
    %185 = vector.broadcast %cst_52 : f32 to vector<8x128xf32>
    %186 = arith.addf %185, %184 : vector<8x128xf32>
    %187 = arith.mulf %181, %164 : vector<8x128xf32>
    %cst_53 = arith.constant 1.000000e+00 : f32
    %188 = vector.broadcast %cst_53 : f32 to vector<8x128xf32>
    %189 = arith.subf %188, %181 : vector<8x128xf32>
    %190 = arith.mulf %186, %164 : vector<8x128xf32>
    %191 = arith.addf %172, %190 : vector<8x128xf32>
    %192 = math.tanh %191 : vector<8x128xf32>
    %193 = arith.mulf %189, %192 : vector<8x128xf32>
    %194 = arith.addf %187, %193 : vector<8x128xf32>
    %c5 = arith.constant 5 : index
    %c0_54 = arith.constant 0 : index
    %c0_55 = arith.constant 0 : index
    %195 = vector.load %arg8[%c5, %c0_54, %c0_55] : memref<8x8x128xf32, #tpu.memory_space<vmem>>, vector<1x8x128xf32>
    %196 = vector.shape_cast %195 : vector<1x8x128xf32> to vector<8x128xf32>
    %197 = vector.shape_cast %194 : vector<8x128xf32> to vector<1x8x128xf32>
    tpu.vector_store %arg8[%c5, %c0_54, %c0_55], %197 {strides = array<i32>} : memref<8x8x128xf32, #tpu.memory_space<vmem>>, vector<1x8x128xf32>,
    %198 = vector.extract_strided_slice %17 {offsets = [6, 0, 0], sizes = [1, 8, 384], strides = [1, 1, 1]} : vector<8x8x384xf32> to vector<1x8x384xf32>
    %199 = vector.shape_cast %198 : vector<1x8x384xf32> to vector<8x384xf32>
    %200 = vector.extract_strided_slice %199 {offsets = [0, 0], sizes = [8, 128], strides = [1, 1]} : vector<8x384xf32> to vector<8x128xf32>
    %201 = vector.extract_strided_slice %199 {offsets = [0, 128], sizes = [8, 128], strides = [1, 1]} : vector<8x384xf32> to vector<8x128xf32>
    %202 = vector.extract_strided_slice %199 {offsets = [0, 256], sizes = [8, 128], strides = [1, 1]} : vector<8x384xf32> to vector<8x128xf32>
    %203 = arith.mulf %5, %194 : vector<8x128xf32>
    %204 = arith.addf %200, %203 : vector<8x128xf32>
    %cst_56 = arith.constant 5.000000e-01 : f32
    %205 = vector.broadcast %cst_56 : f32 to vector<8x128xf32>
    %206 = arith.mulf %205, %204 : vector<8x128xf32>
    %207 = math.tanh %206 : vector<8x128xf32>
    %cst_57 = arith.constant 1.000000e+00 : f32
    %208 = vector.broadcast %cst_57 : f32 to vector<8x128xf32>
    %209 = arith.addf %208, %207 : vector<8x128xf32>
    %cst_58 = arith.constant 5.000000e-01 : f32
    %210 = vector.broadcast %cst_58 : f32 to vector<8x128xf32>
    %211 = arith.mulf %210, %209 : vector<8x128xf32>
    %212 = arith.mulf %8, %194 : vector<8x128xf32>
    %213 = arith.addf %201, %212 : vector<8x128xf32>
    %214 = math.tanh %213 : vector<8x128xf32>
    %cst_59 = arith.constant 1.000000e+00 : f32
    %215 = vector.broadcast %cst_59 : f32 to vector<8x128xf32>
    %216 = arith.addf %215, %214 : vector<8x128xf32>
    %217 = arith.mulf %211, %194 : vector<8x128xf32>
    %cst_60 = arith.constant 1.000000e+00 : f32
    %218 = vector.broadcast %cst_60 : f32 to vector<8x128xf32>
    %219 = arith.subf %218, %211 : vector<8x128xf32>
    %220 = arith.mulf %216, %194 : vector<8x128xf32>
    %221 = arith.addf %202, %220 : vector<8x128xf32>
    %222 = math.tanh %221 : vector<8x128xf32>
    %223 = arith.mulf %219, %222 : vector<8x128xf32>
    %224 = arith.addf %217, %223 : vector<8x128xf32>
    %c6 = arith.constant 6 : index
    %c0_61 = arith.constant 0 : index
    %c0_62 = arith.constant 0 : index
    %225 = vector.load %arg8[%c6, %c0_61, %c0_62] : memref<8x8x128xf32, #tpu.memory_space<vmem>>, vector<1x8x128xf32>
    %226 = vector.shape_cast %225 : vector<1x8x128xf32> to vector<8x128xf32>
    %227 = vector.shape_cast %224 : vector<8x128xf32> to vector<1x8x128xf32>
    tpu.vector_store %arg8[%c6, %c0_61, %c0_62], %227 {strides = array<i32>} : memref<8x8x128xf32, #tpu.memory_space<vmem>>, vector<1x8x128xf32>,
    %228 = vector.extract_strided_slice %17 {offsets = [7, 0, 0], sizes = [1, 8, 384], strides = [1, 1, 1]} : vector<8x8x384xf32> to vector<1x8x384xf32>
    %229 = vector.shape_cast %228 : vector<1x8x384xf32> to vector<8x384xf32>
    %230 = vector.extract_strided_slice %229 {offsets = [0, 0], sizes = [8, 128], strides = [1, 1]} : vector<8x384xf32> to vector<8x128xf32>
    %231 = vector.extract_strided_slice %229 {offsets = [0, 128], sizes = [8, 128], strides = [1, 1]} : vector<8x384xf32> to vector<8x128xf32>
    %232 = vector.extract_strided_slice %229 {offsets = [0, 256], sizes = [8, 128], strides = [1, 1]} : vector<8x384xf32> to vector<8x128xf32>
    %233 = arith.mulf %5, %224 : vector<8x128xf32>
    %234 = arith.addf %230, %233 : vector<8x128xf32>
    %cst_63 = arith.constant 5.000000e-01 : f32
    %235 = vector.broadcast %cst_63 : f32 to vector<8x128xf32>
    %236 = arith.mulf %235, %234 : vector<8x128xf32>
    %237 = math.tanh %236 : vector<8x128xf32>
    %cst_64 = arith.constant 1.000000e+00 : f32
    %238 = vector.broadcast %cst_64 : f32 to vector<8x128xf32>
    %239 = arith.addf %238, %237 : vector<8x128xf32>
    %cst_65 = arith.constant 5.000000e-01 : f32
    %240 = vector.broadcast %cst_65 : f32 to vector<8x128xf32>
    %241 = arith.mulf %240, %239 : vector<8x128xf32>
    %242 = arith.mulf %8, %224 : vector<8x128xf32>
    %243 = arith.addf %231, %242 : vector<8x128xf32>
    %244 = math.tanh %243 : vector<8x128xf32>
    %cst_66 = arith.constant 1.000000e+00 : f32
    %245 = vector.broadcast %cst_66 : f32 to vector<8x128xf32>
    %246 = arith.addf %245, %244 : vector<8x128xf32>
    %247 = arith.mulf %241, %224 : vector<8x128xf32>
    %cst_67 = arith.constant 1.000000e+00 : f32
    %248 = vector.broadcast %cst_67 : f32 to vector<8x128xf32>
    %249 = arith.subf %248, %241 : vector<8x128xf32>
    %250 = arith.mulf %246, %224 : vector<8x128xf32>
    %251 = arith.addf %232, %250 : vector<8x128xf32>
    %252 = math.tanh %251 : vector<8x128xf32>
    %253 = arith.mulf %249, %252 : vector<8x128xf32>
    %254 = arith.addf %247, %253 : vector<8x128xf32>
    %c7 = arith.constant 7 : index
    %c0_68 = arith.constant 0 : index
    %c0_69 = arith.constant 0 : index
    %255 = vector.load %arg8[%c7, %c0_68, %c0_69] : memref<8x8x128xf32, #tpu.memory_space<vmem>>, vector<1x8x128xf32>
    %256 = vector.shape_cast %255 : vector<1x8x128xf32> to vector<8x128xf32>
    %257 = vector.shape_cast %254 : vector<8x128xf32> to vector<1x8x128xf32>
    tpu.vector_store %arg8[%c7, %c0_68, %c0_69], %257 {strides = array<i32>} : memref<8x8x128xf32, #tpu.memory_space<vmem>>, vector<1x8x128xf32>,
    %c0_70 = arith.constant 0 : index
    %c0_71 = arith.constant 0 : index
    %258 = vector.load %arg10[%c0_70, %c0_71] : memref<8x128xf32, #tpu.memory_space<vmem>>, vector<8x128xf32>
    tpu.vector_store %arg10[%c0_70, %c0_71], %254 {strides = array<i32>} : memref<8x128xf32, #tpu.memory_space<vmem>>, vector<8x128xf32>,
    %c0_i32_72 = arith.constant 0 : i32
    %259 = arith.cmpi eq, %arg1, %c0_i32_72 : i32
    %260 = arith.extui %259 : i1 to i32
    %c0_i32_73 = arith.constant 0 : i32
    %261 = arith.cmpi ne, %260, %c0_i32_73 : i32
    scf.if %261 {
      %c0_74 = arith.constant 0 : index
      %c0_75 = arith.constant 0 : index
      %262 = vector.load %arg9[%c0_74, %c0_75] : memref<8x128xf32, #tpu.memory_space<vmem>>, vector<8x128xf32>
      tpu.vector_store %arg9[%c0_74, %c0_75], %254 {strides = array<i32>} : memref<8x128xf32, #tpu.memory_space<vmem>>, vector<8x128xf32>,
    } else {
    }
    return
  }
  func.func @transform_0(%arg0: i32, %arg1: i32) -> (i32, i32, i32) {
    %c0_i32 = arith.constant 0 : i32
    %c0_i32_0 = arith.constant 0 : i32
    %c0_i32_1 = arith.constant 0 : i32
    return %arg1, %c0_i32, %c0_i32_0 : i32, i32, i32
  }
  func.func @transform_1(%arg0: i32, %arg1: i32) -> (i32, i32) {
    %c0_i32 = arith.constant 0 : i32
    %c0_i32_0 = arith.constant 0 : i32
    return %c0_i32, %arg0 : i32, i32
  }
  func.func @transform_2(%arg0: i32, %arg1: i32) -> (i32, i32) {
    %c0_i32 = arith.constant 0 : i32
    %c0_i32_0 = arith.constant 0 : i32
    return %c0_i32, %arg0 : i32, i32
  }
  func.func @transform_3(%arg0: i32, %arg1: i32) -> (i32, i32) {
    %c0_i32 = arith.constant 0 : i32
    %c0_i32_0 = arith.constant 0 : i32
    return %c0_i32, %arg0 : i32, i32
  }
  func.func @transform_4(%arg0: i32, %arg1: i32) -> (i32, i32) {
    %c0_i32 = arith.constant 0 : i32
    %c0_i32_0 = arith.constant 0 : i32
    return %c0_i32, %arg0 : i32, i32
  }
  func.func @transform_5(%arg0: i32, %arg1: i32) -> (i32, i32) {
    %c0_i32 = arith.constant 0 : i32
    %c0_i32_0 = arith.constant 0 : i32
    return %c0_i32, %arg0 : i32, i32
  }
  func.func @transform_6(%arg0: i32, %arg1: i32) -> (i32, i32, i32) {
    %c0_i32 = arith.constant 0 : i32
    %c0_i32_0 = arith.constant 0 : i32
    return %arg1, %c0_i32, %arg0 : i32, i32, i32
  }
  func.func @transform_7(%arg0: i32, %arg1: i32) -> (i32, i32) {
    %c0_i32 = arith.constant 0 : i32
    %c0_i32_0 = arith.constant 0 : i32
    return %c0_i32, %arg0 : i32, i32
  }
}

</mosaic_0001>

<llo_original>
// kernel: tpu_custom_call.1
$region0: #{tpu_custom_call.1}
  #allocation0 [shape = 'u32[]', space=smem, size = 0x4, offset = 0x4, fixed_abs, tag = 'smem constant byte address 0x4 - core index']
  #allocation1 [shape = 'u32[144,128]{1,0:T(1,128)}', space=vmem, size = 0x12000, scoped, tag = 'internal scratch']
  #allocation2 [shape = 'f32[8,128]{1,0:T(8,128)}', space=vmem, size = 0x1000, scoped, tag = 'scratch operand']
  %s0 = inlined_call_operand.hbm [shape: f32[8,8,128], index: 0, kind: input, shape index: {}]
  %s1 = inlined_call_operand.hbm [shape: f32[8,128], index: 1, kind: input, shape index: {}]
  %s2 = inlined_call_operand.hbm [shape: f32[128,384], index: 2, kind: input, shape index: {}]
  %s3 = inlined_call_operand.vmem [shape: f32[1,384], index: 3, kind: input, shape index: {}]
  %s4 = inlined_call_operand.vmem [shape: f32[1,128], index: 4, kind: input, shape index: {}]
  %s5 = inlined_call_operand.vmem [shape: f32[1,128], index: 5, kind: input, shape index: {}]
  %s6 = inlined_call_operand.hbm [shape: f32[8,8,128], index: 6, kind: output, shape index: {0}]
  %s7 = inlined_call_operand.hbm [shape: f32[8,128], index: 7, kind: output, shape index: {1}]
  %8 = xla_tuple %s6, %s7
  %s9 = sld [smem:[#allocation0]]
  $region62: #{tpu_custom_call.1} parent=0
    _
  %s11 = ssub.s32 1, %s9
  %s12 = scalar_select 0, %s11, %s9
  $region1: #{tpu_custom_call.1} parent=0
    #allocation3 [shape = 'u8[32768]{0}', space=vmem, size = 0x8000, scoped, tag = 'input window, operand 0, single buffered']
    #allocation4 [shape = 's32[1]{0}', space=sflag, size = 0x4, scoped, tag = 'scoped memory for tpu_custom_call.1']
    #allocation5 [shape = 's32[1]{0}', space=sflag, size = 0x4, scoped, tag = 'scoped memory for tpu_custom_call.1']
    #allocation6 [shape = 'u8[4096]{0}', space=vmem, size = 0x1000, scoped, tag = 'input window, operand 1, single buffered']
    #allocation7 [shape = 's32[1]{0}', space=sflag, size = 0x4, scoped, tag = 'scoped memory for tpu_custom_call.1']
    #allocation8 [shape = 'u8[196608]{0}', space=vmem, size = 0x30000, scoped, tag = 'input window, operand 2, single buffered']
    #allocation9 [shape = 'u8[32768]{0}', space=vmem, size = 0x8000, scoped, tag = 'output window, operand 0, single buffered']
    #allocation10 [shape = 'u8[4096]{0}', space=vmem, size = 0x1000, scoped, tag = 'output window, operand 1, single buffered']
    #allocation11 [shape = 's32[1]{0}', space=sflag, size = 0x4, scoped, tag = 'scoped memory for tpu_custom_call.1']
    %13 = vsyncpa [#allocation4], 0
    %14 = vsyncpa [#allocation7], 0
    %15 = vsyncpa [#allocation5], 0
    %16 = vsyncpa [#allocation11], 0
    // Predicated region
    $region2: #{tpu_custom_call.1} parent=1 // pred_check
      _
    $region3: #{tpu_custom_call.1} parent=1 // pred_check_branch
      %18 = sbr.rel (0) target = $region5
    $region4: #{tpu_custom_call.1} parent=1 // pred_region
      %s20 = ssub.s32 1024, 1024
      %21 = vsyncadd [#allocation4], %s20
      %s22 = sshll.u32 [#allocation3], 4
      %s23 = int_to_ptr.vmem [resolvable:$true] %s22
      %28 = dma.hbm_to_vmem [thread:$0]  %s0, 1024, %s23, [#allocation4], 128, 128, 8
    $region5: #{tpu_custom_call.1} parent=1 // pred_fallthru
      _
    // Predicated region
    $region6: #{tpu_custom_call.1} parent=1 // pred_check
      _
    $region7: #{tpu_custom_call.1} parent=1 // pred_check_branch
      %30 = sbr.rel (0) target = $region9
    $region8: #{tpu_custom_call.1} parent=1 // pred_region
      %s32 = ssub.s32 128, 128
      %33 = vsyncadd [#allocation7], %s32
      %s35 = sshll.u32 [#allocation6], 4
      %s36 = int_to_ptr.vmem [resolvable:$true] %s35
      %38 = dma.hbm_to_vmem [thread:$0]  %s1, 128, %s36, [#allocation7]
    $region9: #{tpu_custom_call.1} parent=1 // pred_fallthru
      _
    // Predicated region
    $region10: #{tpu_custom_call.1} parent=1 // pred_check
      _
    $region11: #{tpu_custom_call.1} parent=1 // pred_check_branch
      %40 = sbr.rel (0) target = $region13
    $region12: #{tpu_custom_call.1} parent=1 // pred_region
      %s42 = ssub.s32 6144, 6144
      %43 = vsyncadd [#allocation7], %s42
      %s44 = sshll.u32 [#allocation8], 4
      %s45 = int_to_ptr.vmem [resolvable:$true] %s44
      %50 = dma.hbm_to_vmem [thread:$0]  %s2, 6144, %s45, [#allocation7], 384, 384, 24
    $region13: #{tpu_custom_call.1} parent=1 // pred_fallthru
      _
    // Predicated region
    $region14: #{tpu_custom_call.1} parent=1 // pred_check
      _
    $region15: #{tpu_custom_call.1} parent=1 // pred_check_branch
      %52 = sbr.rel (0) target = $region17
    $region16: #{tpu_custom_call.1} parent=1 // pred_region
      _
    $region17: #{tpu_custom_call.1} parent=1 // pred_fallthru
      _
    // Predicated region
    $region18: #{tpu_custom_call.1} parent=1 // pred_check
      _
    $region19: #{tpu_custom_call.1} parent=1 // pred_check_branch
      %54 = sbr.rel (0) target = $region21
    $region20: #{tpu_custom_call.1} parent=1 // pred_region
      _
    $region21: #{tpu_custom_call.1} parent=1 // pred_fallthru
      _
    // Predicated region
    $region22: #{tpu_custom_call.1} parent=1 // pred_check
      _
    $region23: #{tpu_custom_call.1} parent=1 // pred_check_branch
      %56 = sbr.rel (0) target = $region25
    $region24: #{tpu_custom_call.1} parent=1 // pred_region
      _
    $region25: #{tpu_custom_call.1} parent=1 // pred_fallthru
      _
    // Predicated region
    $region26: #{tpu_custom_call.1} parent=1 // pred_check
      _
    $region27: #{tpu_custom_call.1} parent=1 // pred_check_branch
      %58 = sbr.rel (0) target = $region29
    $region28: #{tpu_custom_call.1} parent=1 // pred_region
      %59 = dma.done [#allocation4], 1024
    $region29: #{tpu_custom_call.1} parent=1 // pred_fallthru
      _
    // Predicated region
    $region30: #{tpu_custom_call.1} parent=1 // pred_check
      _
    $region31: #{tpu_custom_call.1} parent=1 // pred_check_branch
      %61 = sbr.rel (0) target = $region33
    $region32: #{tpu_custom_call.1} parent=1 // pred_region
      %62 = dma.done [#allocation7], 128
    $region33: #{tpu_custom_call.1} parent=1 // pred_fallthru
      _
    // Predicated region
    $region34: #{tpu_custom_call.1} parent=1 // pred_check
      _
    $region35: #{tpu_custom_call.1} parent=1 // pred_check_branch
      %64 = sbr.rel (0) target = $region37
    $region36: #{tpu_custom_call.1} parent=1 // pred_region
      %65 = dma.done [#allocation7], 6144
    $region37: #{tpu_custom_call.1} parent=1 // pred_fallthru
      _
    %p66 = scmp.eq.s32.totalorder 0, 0
    // Predicated region
    $region38: #{tpu_custom_call.1} parent=1 // pred_check
      %p67 = pneg %p66
    $region39: #{tpu_custom_call.1} parent=1 // pred_check_branch
      %69 = sbr.rel (%p67) target = $region41
    $region40: #{tpu_custom_call.1} parent=1 // pred_region
      %v70 = vld [vmem:[#allocation6] sm:$0xff]
      %71 = vst [vmem:[#allocation2] sm:$0xff] %v70
    $region41: #{tpu_custom_call.1} parent=1 // pred_fallthru
      _
    %v72 = vld [vmem:[%s4] sm:$0x1]
    %v74 = vlaneseq
    %v75 = vshrl.u32 %v74, 7
    %v76 = vsub.s32 0, %v75
    %v77 = vrot.slane %v72, %v76
    %v79 = vld [vmem:[%s5] sm:$0x1]
    %v81 = vlaneseq
    %v82 = vshrl.u32 %v81, 7
    %v83 = vsub.s32 0, %v82
    %v84 = vrot.slane %v79, %v83
    %v86 = vld [vmem:[%s3] sm:$0x7]
    %v87 = vld [vmem:[#allocation8] sm:$0xff]
    %v88 = vld [vmem:[#allocation8 + $0x8] sm:$0xff]
    %v89 = vld [vmem:[#allocation8 + $0x10] sm:$0xff]
    %v90 = vld [vmem:[#allocation8 + $0x18] sm:$0xff]
    %v91 = vld [vmem:[#allocation8 + $0x20] sm:$0xff]
    %v92 = vld [vmem:[#allocation8 + $0x28] sm:$0xff]
    %v93 = vld [vmem:[#allocation8 + $0x30] sm:$0xff]
    %v94 = vld [vmem:[#allocation8 + $0x38] sm:$0xff]
    %v95 = vld [vmem:[#allocation8 + $0x40] sm:$0xff]
    %v96 = vld [vmem:[#allocation8 + $0x48] sm:$0xff]
    %v97 = vld [vmem:[#allocation8 + $0x50] sm:$0xff]
    %v98 = vld [vmem:[#allocation8 + $0x58] sm:$0xff]
    %v99 = vld [vmem:[#allocation8 + $0x60] sm:$0xff]
    %v100 = vld [vmem:[#allocation8 + $0x68] sm:$0xff]
    %v101 = vld [vmem:[#allocation8 + $0x70] sm:$0xff]
    %v102 = vld [vmem:[#allocation8 + $0x78] sm:$0xff]
    %v103 = vld [vmem:[#allocation8 + $0x80] sm:$0xff]
    %v104 = vld [vmem:[#allocation8 + $0x88] sm:$0xff]
    %v105 = vld [vmem:[#allocation8 + $0x90] sm:$0xff]
    %v106 = vld [vmem:[#allocation8 + $0x98] sm:$0xff]
    %v107 = vld [vmem:[#allocation8 + $0xa0] sm:$0xff]
    %v108 = vld [vmem:[#allocation8 + $0xa8] sm:$0xff]
    %v109 = vld [vmem:[#allocation8 + $0xb0] sm:$0xff]
    %v110 = vld [vmem:[#allocation8 + $0xb8] sm:$0xff]
    %v111 = vld [vmem:[#allocation8 + $0xc0] sm:$0xff]
    %v112 = vld [vmem:[#allocation8 + $0xc8] sm:$0xff]
    %v113 = vld [vmem:[#allocation8 + $0xd0] sm:$0xff]
    %v114 = vld [vmem:[#allocation8 + $0xd8] sm:$0xff]
    %v115 = vld [vmem:[#allocation8 + $0xe0] sm:$0xff]
    %v116 = vld [vmem:[#allocation8 + $0xe8] sm:$0xff]
    %v117 = vld [vmem:[#allocation8 + $0xf0] sm:$0xff]
    %v118 = vld [vmem:[#allocation8 + $0xf8] sm:$0xff]
    %v119 = vld [vmem:[#allocation8 + $0x100] sm:$0xff]
    %v120 = vld [vmem:[#allocation8 + $0x108] sm:$0xff]
    %v121 = vld [vmem:[#allocation8 + $0x110] sm:$0xff]
    %v122 = vld [vmem:[#allocation8 + $0x118] sm:$0xff]
    %v123 = vld [vmem:[#allocation8 + $0x120] sm:$0xff]
    %v124 = vld [vmem:[#allocation8 + $0x128] sm:$0xff]
    %v125 = vld [vmem:[#allocation8 + $0x130] sm:$0xff]
    %v126 = vld [vmem:[#allocation8 + $0x138] sm:$0xff]
    %v127 = vld [vmem:[#allocation8 + $0x140] sm:$0xff]
    %v128 = vld [vmem:[#allocation8 + $0x148] sm:$0xff]
    %v129 = vld [vmem:[#allocation8 + $0x150] sm:$0xff]
    %v130 = vld [vmem:[#allocation8 + $0x158] sm:$0xff]
    %v131 = vld [vmem:[#allocation8 + $0x160] sm:$0xff]
    %v132 = vld [vmem:[#allocation8 + $0x168] sm:$0xff]
    %v133 = vld [vmem:[#allocation8 + $0x170] sm:$0xff]
    %v134 = vld [vmem:[#allocation8 + $0x178] sm:$0xff]
    %v135 = vld [vmem:[#allocation2] sm:$0xff]
    %v136 = vld [vmem:[#allocation3] sm:$0xff]
    %v137 = vld [vmem:[#allocation3 + $0x8] sm:$0xff]
    %v138 = vld [vmem:[#allocation3 + $0x10] sm:$0xff]
    %v139 = vld [vmem:[#allocation3 + $0x18] sm:$0xff]
    %v140 = vld [vmem:[#allocation3 + $0x20] sm:$0xff]
    %v141 = vld [vmem:[#allocation3 + $0x28] sm:$0xff]
    %v142 = vld [vmem:[#allocation3 + $0x30] sm:$0xff]
    %v143 = vld [vmem:[#allocation3 + $0x38] sm:$0xff]
    %v145 = vlaneseq
    %v146 = vshrl.u32 %v145, 7
    %v147 = vsub.s32 0, %v146
    %v148 = vrot.slane %v86, %v147
    %v149 = vlaneseq
    %v150 = vshrl.u32 %v149, 7
    %v151 = vsub.s32 1, %v150
    %v152 = vrot.slane %v86, %v151
    %v153 = vlaneseq
    %v154 = vshrl.u32 %v153, 7
    %v155 = vsub.s32 2, %v154
    %v156 = vrot.slane %v86, %v155
    %160 = vmatprep.subr.mxu0 %v133
    %161 = vmatpush1.msra.mxu0 %v132
    %162 = vmatprep.subr.mxu0 %v130
    %163 = vmatpush1.msra.mxu0 %v129
    %164 = vmatprep.subr.mxu0 %v127
    %165 = vmatpush1.msra.mxu0 %v126
    %166 = vmatprep.subr.mxu0 %v124
    %167 = vmatpush1.msra.mxu0 %v123
    %168 = vmatprep.subr.mxu0 %v121
    %169 = vmatpush1.msra.mxu0 %v120
    %170 = vmatprep.subr.mxu0 %v118
    %171 = vmatpush1.msra.mxu0 %v117
    %172 = vmatprep.subr.mxu0 %v115
    %173 = vmatpush1.msra.mxu0 %v114
    %174 = vmatprep.subr.mxu0 %v112
    %175 = vmatpush1.msra.mxu0 %v111
    %176 = vmatprep.subr.mxu0 %v109
    %177 = vmatpush1.msra.mxu0 %v108
    %178 = vmatprep.subr.mxu0 %v106
    %179 = vmatpush1.msra.mxu0 %v105
    %180 = vmatprep.subr.mxu0 %v103
    %181 = vmatpush1.msra.mxu0 %v102
    %182 = vmatprep.subr.mxu0 %v100
    %183 = vmatpush1.msra.mxu0 %v99
    %184 = vmatprep.subr.mxu0 %v97
    %185 = vmatpush1.msra.mxu0 %v96
    %186 = vmatprep.subr.mxu0 %v94
    %187 = vmatpush1.msra.mxu0 %v93
    %188 = vmatprep.subr.mxu0 %v91
    %189 = vmatpush1.msra.mxu0 %v90
    %190 = vmatprep.subr.mxu0 %v88
    %191 = vmatpush1.msra.mxu0 %v87
    %192 = vmatprep.subr.mxu0 0.0
    %193 = vmatpush2.msra.mxu0 0.0
    %194 = vmatprep.subr.mxu0 0.0
    %195 = vmatpush2.msra.mxu0 0.0
    %196 = vmatprep.subr.mxu0 0.0
    %197 = vmatpush2.msra.mxu0 0.0
    %198 = vmatprep.subr.mxu0 0.0
    %199 = vmatpush2.msra.mxu0 0.0
    %200 = vmatprep.subr.mxu0 0.0
    %201 = vmatpush2.msra.mxu0 0.0
    %202 = vmatprep.subr.mxu0 0.0
    %203 = vmatpush2.msra.mxu0 0.0
    %204 = vmatprep.subr.mxu0 0.0
    %205 = vmatpush2.msra.mxu0 0.0
    %206 = vmatprep.subr.mxu0 0.0
    %207 = vmatpush2.msra.mxu0 0.0
    %208 = vmatprep.subr.mxu0 0.0
    %209 = vmatpush2.msra.mxu0 0.0
    %210 = vmatprep.subr.mxu0 0.0
    %211 = vmatpush2.msra.mxu0 0.0
    %212 = vmatprep.subr.mxu0 0.0
    %213 = vmatpush2.msra.mxu0 0.0
    %214 = vmatprep.subr.mxu0 0.0
    %215 = vmatpush2.msra.mxu0 0.0
    %216 = vmatprep.subr.mxu0 0.0
    %217 = vmatpush2.msra.mxu0 0.0
    %218 = vmatprep.subr.mxu0 0.0
    %219 = vmatpush2.msra.mxu0 0.0
    %220 = vmatprep.subr.mxu0 0.0
    %221 = vmatpush2.msra.mxu0 0.0
    %222 = vmatprep.subr.mxu0 0.0
    %223 = vmatpush2.msra.mxu0 0.0
    %224 = vmatprep.mubr.f32.mxu0 0.0
    %225 = vmatmul.mubr.f32.gmra.mxu0 %v136
    %v226 = vpop.f32.mrf.mxu0
    %v227 = vadd.f32 %v148, %v226
    %v228 = vpop.f32.mrf.mxu0
    %v229 = vadd.f32 %v152, %v228
    %230 = vmatprep.mubr.f32.mxu0 0.0
    %231 = vmatmul.mubr.f32.gmra.mxu0 %v137
    %v232 = vpop.f32.mrf.mxu0
    %v233 = vadd.f32 %v148, %v232
    %v234 = vpop.f32.mrf.mxu0
    %v235 = vadd.f32 %v152, %v234
    %236 = vmatprep.mubr.f32.mxu0 0.0
    %237 = vmatmul.mubr.f32.gmra.mxu0 %v138
    %v238 = vpop.f32.mrf.mxu0
    %v239 = vadd.f32 %v148, %v238
    %v240 = vpop.f32.mrf.mxu0
    %v241 = vadd.f32 %v152, %v240
    %242 = vmatprep.mubr.f32.mxu0 0.0
    %243 = vmatmul.mubr.f32.gmra.mxu0 %v139
    %v244 = vpop.f32.mrf.mxu0
    %v245 = vadd.f32 %v148, %v244
    %v246 = vpop.f32.mrf.mxu0
    %v247 = vadd.f32 %v152, %v246
    %248 = vmatprep.mubr.f32.mxu0 0.0
    %249 = vmatmul.mubr.f32.gmra.mxu0 %v140
    %v250 = vpop.f32.mrf.mxu0
    %v251 = vadd.f32 %v148, %v250
    %v252 = vpop.f32.mrf.mxu0
    %v253 = vadd.f32 %v152, %v252
    %254 = vmatprep.mubr.f32.mxu0 0.0
    %255 = vmatmul.mubr.f32.gmra.mxu0 %v141
    %v256 = vpop.f32.mrf.mxu0
    %v257 = vadd.f32 %v148, %v256
    %v258 = vpop.f32.mrf.mxu0
    %v259 = vadd.f32 %v152, %v258
    %260 = vmatprep.mubr.f32.mxu0 0.0
    %261 = vmatmul.mubr.f32.gmra.mxu0 %v142
    %v262 = vpop.f32.mrf.mxu0
    %v263 = vadd.f32 %v148, %v262
    %v264 = vpop.f32.mrf.mxu0
    %v265 = vadd.f32 %v152, %v264
    %266 = vmatprep.mubr.f32.mxu0 0.0
    %267 = vmatmul.mubr.f32.gmra.mxu0 %v143
    %v268 = vpop.f32.mrf.mxu0
    %v269 = vadd.f32 %v148, %v268
    %v270 = vpop.f32.mrf.mxu0
    %v271 = vadd.f32 %v152, %v270
    %272 = vdwg.mxu0
    %273 = vmatprep.subr.mxu0 0.0
    %274 = vmatpush1.msra.mxu0 %v134
    %275 = vmatprep.subr.mxu0 0.0
    %276 = vmatpush1.msra.mxu0 %v131
    %277 = vmatprep.subr.mxu0 0.0
    %278 = vmatpush1.msra.mxu0 %v128
    %279 = vmatprep.subr.mxu0 0.0
    %280 = vmatpush1.msra.mxu0 %v125
    %281 = vmatprep.subr.mxu0 0.0
    %282 = vmatpush1.msra.mxu0 %v122
    %283 = vmatprep.subr.mxu0 0.0
    %284 = vmatpush1.msra.mxu0 %v119
    %285 = vmatprep.subr.mxu0 0.0
    %286 = vmatpush1.msra.mxu0 %v116
    %287 = vmatprep.subr.mxu0 0.0
    %288 = vmatpush1.msra.mxu0 %v113
    %289 = vmatprep.subr.mxu0 0.0
    %290 = vmatpush1.msra.mxu0 %v110
    %291 = vmatprep.subr.mxu0 0.0
    %292 = vmatpush1.msra.mxu0 %v107
    %293 = vmatprep.subr.mxu0 0.0
    %294 = vmatpush1.msra.mxu0 %v104
    %295 = vmatprep.subr.mxu0 0.0
    %296 = vmatpush1.msra.mxu0 %v101
    %297 = vmatprep.subr.mxu0 0.0
    %298 = vmatpush1.msra.mxu0 %v98
    %299 = vmatprep.subr.mxu0 0.0
    %300 = vmatpush1.msra.mxu0 %v95
    %301 = vmatprep.subr.mxu0 0.0
    %302 = vmatpush1.msra.mxu0 %v92
    %303 = vmatprep.subr.mxu0 0.0
    %304 = vmatpush1.msra.mxu0 %v89
    %305 = vmatprep.subr.mxu0 0.0
    %306 = vmatpush2.msra.mxu0 0.0
    %307 = vmatprep.subr.mxu0 0.0
    %308 = vmatpush2.msra.mxu0 0.0
    %309 = vmatprep.subr.mxu0 0.0
    %310 = vmatpush2.msra.mxu0 0.0
    %311 = vmatprep.subr.mxu0 0.0
    %312 = vmatpush2.msra.mxu0 0.0
    %313 = vmatprep.subr.mxu0 0.0
    %314 = vmatpush2.msra.mxu0 0.0
    %315 = vmatprep.subr.mxu0 0.0
    %316 = vmatpush2.msra.mxu0 0.0
    %317 = vmatprep.subr.mxu0 0.0
    %318 = vmatpush2.msra.mxu0 0.0
    %319 = vmatprep.subr.mxu0 0.0
    %320 = vmatpush2.msra.mxu0 0.0
    %321 = vmatprep.subr.mxu0 0.0
    %322 = vmatpush2.msra.mxu0 0.0
    %323 = vmatprep.subr.mxu0 0.0
    %324 = vmatpush2.msra.mxu0 0.0
    %325 = vmatprep.subr.mxu0 0.0
    %326 = vmatpush2.msra.mxu0 0.0
    %327 = vmatprep.subr.mxu0 0.0
    %328 = vmatpush2.msra.mxu0 0.0
    %329 = vmatprep.subr.mxu0 0.0
    %330 = vmatpush2.msra.mxu0 0.0
    %331 = vmatprep.subr.mxu0 0.0
    %332 = vmatpush2.msra.mxu0 0.0
    %333 = vmatprep.subr.mxu0 0.0
    %334 = vmatpush2.msra.mxu0 0.0
    %335 = vmatprep.subr.mxu0 0.0
    %336 = vmatpush2.msra.mxu0 0.0
    %337 = vmatprep.mubr.f32.mxu0 0.0
    %338 = vmatmul.mubr.f32.gmra.mxu0 %v136
    %v339 = vpop.f32.mrf.mxu0
    %v340 = vadd.f32 %v156, %v339
    %v341 = vpop.f32.mrf.mxu0
    %342 = vmatprep.mubr.f32.mxu0 0.0
    %343 = vmatmul.mubr.f32.gmra.mxu0 %v137
    %v344 = vpop.f32.mrf.mxu0
    %v345 = vadd.f32 %v156, %v344
    %v346 = vpop.f32.mrf.mxu0
    %347 = vmatprep.mubr.f32.mxu0 0.0
    %348 = vmatmul.mubr.f32.gmra.mxu0 %v138
    %v349 = vpop.f32.mrf.mxu0
    %v350 = vadd.f32 %v156, %v349
    %v351 = vpop.f32.mrf.mxu0
    %352 = vmatprep.mubr.f32.mxu0 0.0
    %353 = vmatmul.mubr.f32.gmra.mxu0 %v139
    %v354 = vpop.f32.mrf.mxu0
    %v355 = vadd.f32 %v156, %v354
    %v356 = vpop.f32.mrf.mxu0
    %357 = vmatprep.mubr.f32.mxu0 0.0
    %358 = vmatmul.mubr.f32.gmra.mxu0 %v140
    %v359 = vpop.f32.mrf.mxu0
    %v360 = vadd.f32 %v156, %v359
    %v361 = vpop.f32.mrf.mxu0
    %362 = vmatprep.mubr.f32.mxu0 0.0
    %363 = vmatmul.mubr.f32.gmra.mxu0 %v141
    %v364 = vpop.f32.mrf.mxu0
    %v365 = vadd.f32 %v156, %v364
    %v366 = vpop.f32.mrf.mxu0
    %367 = vmatprep.mubr.f32.mxu0 0.0
    %368 = vmatmul.mubr.f32.gmra.mxu0 %v142
    %v369 = vpop.f32.mrf.mxu0
    %v370 = vadd.f32 %v156, %v369
    %v371 = vpop.f32.mrf.mxu0
    %372 = vmatprep.mubr.f32.mxu0 0.0
    %373 = vmatmul.mubr.f32.gmra.mxu0 %v143
    %v374 = vpop.f32.mrf.mxu0
    %v375 = vadd.f32 %v156, %v374
    %v376 = vpop.f32.mrf.mxu0
    %377 = vdwg.mxu0
    %v378 = vmul.f32 %v77, %v135
    %v379 = vadd.f32 %v227, %v378
    %v380 = vmul.f32 %v379, 0.5
    %v381 = vtanh.pop %v380
    %v382 = vadd.f32 %v381, 1.0
    %v383 = vmul.f32 %v382, 0.5
    %v384 = vmul.f32 %v84, %v135
    %v385 = vadd.f32 %v229, %v384
    %v386 = vtanh.pop %v385
    %v387 = vadd.f32 %v386, 1.0
    %v388 = vmul.f32 %v383, %v135
    %v389 = vsub.f32 1.0, %v383
    %v390 = vmul.f32 %v387, %v135
    %v391 = vadd.f32 %v340, %v390
    %v392 = vtanh.pop %v391
    %v393 = vmul.f32 %v389, %v392
    %v394 = vadd.f32 %v388, %v393
    %395 = vst [vmem:[#allocation9] sm:$0xff] %v394
    %v396 = vmul.f32 %v77, %v394
    %v397 = vadd.f32 %v233, %v396
    %v398 = vmul.f32 %v397, 0.5
    %v399 = vtanh.pop %v398
    %v400 = vadd.f32 %v399, 1.0
    %v401 = vmul.f32 %v400, 0.5
    %v402 = vmul.f32 %v84, %v394
    %v403 = vadd.f32 %v235, %v402
    %v404 = vtanh.pop %v403
    %v405 = vadd.f32 %v404, 1.0
    %v406 = vmul.f32 %v401, %v394
    %v407 = vsub.f32 1.0, %v401
    %v408 = vmul.f32 %v405, %v394
    %v409 = vadd.f32 %v345, %v408
    %v410 = vtanh.pop %v409
    %v411 = vmul.f32 %v407, %v410
    %v412 = vadd.f32 %v406, %v411
    %s413 = scalar_lea.vmem [#allocation9], 8
    %414 = vst [vmem:[%s413] sm:$0xff] %v412
    %v415 = vmul.f32 %v77, %v412
    %v416 = vadd.f32 %v239, %v415
    %v417 = vmul.f32 %v416, 0.5
    %v418 = vtanh.pop %v417
    %v419 = vadd.f32 %v418, 1.0
    %v420 = vmul.f32 %v419, 0.5
    %v421 = vmul.f32 %v84, %v412
    %v422 = vadd.f32 %v241, %v421
    %v423 = vtanh.pop %v422
    %v424 = vadd.f32 %v423, 1.0
    %v425 = vmul.f32 %v420, %v412
    %v426 = vsub.f32 1.0, %v420
    %v427 = vmul.f32 %v424, %v412
    %v428 = vadd.f32 %v350, %v427
    %v429 = vtanh.pop %v428
    %v430 = vmul.f32 %v426, %v429
    %v431 = vadd.f32 %v425, %v430
    %s432 = scalar_lea.vmem [#allocation9], 16
    %433 = vst [vmem:[%s432] sm:$0xff] %v431
    %v434 = vmul.f32 %v77, %v431
    %v435 = vadd.f32 %v245, %v434
    %v436 = vmul.f32 %v435, 0.5
    %v437 = vtanh.pop %v436
    %v438 = vadd.f32 %v437, 1.0
    %v439 = vmul.f32 %v438, 0.5
    %v440 = vmul.f32 %v84, %v431
    %v441 = vadd.f32 %v247, %v440
    %v442 = vtanh.pop %v441
    %v443 = vadd.f32 %v442, 1.0
    %v444 = vmul.f32 %v439, %v431
    %v445 = vsub.f32 1.0, %v439
    %v446 = vmul.f32 %v443, %v431
    %v447 = vadd.f32 %v355, %v446
    %v448 = vtanh.pop %v447
    %v449 = vmul.f32 %v445, %v448
    %v450 = vadd.f32 %v444, %v449
    %s451 = scalar_lea.vmem [#allocation9], 24
    %452 = vst [vmem:[%s451] sm:$0xff] %v450
    %v453 = vmul.f32 %v77, %v450
    %v454 = vadd.f32 %v251, %v453
    %v455 = vmul.f32 %v454, 0.5
    %v456 = vtanh.pop %v455
    %v457 = vadd.f32 %v456, 1.0
    %v458 = vmul.f32 %v457, 0.5
    %v459 = vmul.f32 %v84, %v450
    %v460 = vadd.f32 %v253, %v459
    %v461 = vtanh.pop %v460
    %v462 = vadd.f32 %v461, 1.0
    %v463 = vmul.f32 %v458, %v450
    %v464 = vsub.f32 1.0, %v458
    %v465 = vmul.f32 %v462, %v450
    %v466 = vadd.f32 %v360, %v465
    %v467 = vtanh.pop %v466
    %v468 = vmul.f32 %v464, %v467
    %v469 = vadd.f32 %v463, %v468
    %s470 = scalar_lea.vmem [#allocation9], 32
    %471 = vst [vmem:[%s470] sm:$0xff] %v469
    %v472 = vmul.f32 %v77, %v469
    %v473 = vadd.f32 %v257, %v472
    %v474 = vmul.f32 %v473, 0.5
    %v475 = vtanh.pop %v474
    %v476 = vadd.f32 %v475, 1.0
    %v477 = vmul.f32 %v476, 0.5
    %v478 = vmul.f32 %v84, %v469
    %v479 = vadd.f32 %v259, %v478
    %v480 = vtanh.pop %v479
    %v481 = vadd.f32 %v480, 1.0
    %v482 = vmul.f32 %v477, %v469
    %v483 = vsub.f32 1.0, %v477
    %v484 = vmul.f32 %v481, %v469
    %v485 = vadd.f32 %v365, %v484
    %v486 = vtanh.pop %v485
    %v487 = vmul.f32 %v483, %v486
    %v488 = vadd.f32 %v482, %v487
    %s489 = scalar_lea.vmem [#allocation9], 40
    %490 = vst [vmem:[%s489] sm:$0xff] %v488
    %v491 = vmul.f32 %v77, %v488
    %v492 = vadd.f32 %v263, %v491
    %v493 = vmul.f32 %v492, 0.5
    %v494 = vtanh.pop %v493
    %v495 = vadd.f32 %v494, 1.0
    %v496 = vmul.f32 %v495, 0.5
    %v497 = vmul.f32 %v84, %v488
    %v498 = vadd.f32 %v265, %v497
    %v499 = vtanh.pop %v498
    %v500 = vadd.f32 %v499, 1.0
    %v501 = vmul.f32 %v496, %v488
    %v502 = vsub.f32 1.0, %v496
    %v503 = vmul.f32 %v500, %v488
    %v504 = vadd.f32 %v370, %v503
    %v505 = vtanh.pop %v504
    %v506 = vmul.f32 %v502, %v505
    %v507 = vadd.f32 %v501, %v506
    %s508 = scalar_lea.vmem [#allocation9], 48
    %509 = vst [vmem:[%s508] sm:$0xff] %v507
    %v510 = vmul.f32 %v77, %v507
    %v511 = vadd.f32 %v269, %v510
    %v512 = vmul.f32 %v511, 0.5
    %v513 = vtanh.pop %v512
    %v514 = vadd.f32 %v513, 1.0
    %v515 = vmul.f32 %v514, 0.5
    %v516 = vmul.f32 %v84, %v507
    %v517 = vadd.f32 %v271, %v516
    %v518 = vtanh.pop %v517
    %v519 = vadd.f32 %v518, 1.0
    %v520 = vmul.f32 %v515, %v507
    %v521 = vsub.f32 1.0, %v515
    %v522 = vmul.f32 %v519, %v507
    %v523 = vadd.f32 %v375, %v522
    %v524 = vtanh.pop %v523
    %v525 = vmul.f32 %v521, %v524
    %v526 = vadd.f32 %v520, %v525
    %s527 = scalar_lea.vmem [#allocation9], 56
    %528 = vst [vmem:[%s527] sm:$0xff] %v526
    %529 = vst [vmem:[#allocation2] sm:$0xff] %v526
    // Predicated region
    $region42: #{tpu_custom_call.1} parent=1 // pred_check
      %p530 = pneg %p66
    $region43: #{tpu_custom_call.1} parent=1 // pred_check_branch
      %532 = sbr.rel (%p530) target = $region45
    $region44: #{tpu_custom_call.1} parent=1 // pred_region
      %533 = vst [vmem:[#allocation10] sm:$0xff] %v526
    $region45: #{tpu_custom_call.1} parent=1 // pred_fallthru
      _
    // Predicated region
    $region46: #{tpu_custom_call.1} parent=1 // pred_check
      _
    $region47: #{tpu_custom_call.1} parent=1 // pred_check_branch
      %535 = sbr.rel (0) target = $region49
    $region48: #{tpu_custom_call.1} parent=1 // pred_region
      %s537 = ssub.s32 1024, 1024
      %538 = vsyncadd [#allocation5], %s537
      %s539 = sshll.u32 [#allocation9], 4
      %s540 = int_to_ptr.vmem [resolvable:$true] %s539
      %545 = dma.vmem_to_hbm [thread:$0]  %s540, 1024, %s6, [#allocation5], 128, 128, 8
    $region49: #{tpu_custom_call.1} parent=1 // pred_fallthru
      _
    // Predicated region
    $region50: #{tpu_custom_call.1} parent=1 // pred_check
      _
    $region51: #{tpu_custom_call.1} parent=1 // pred_check_branch
      %547 = sbr.rel (0) target = $region53
    $region52: #{tpu_custom_call.1} parent=1 // pred_region
      %s549 = ssub.s32 128, 128
      %550 = vsyncadd [#allocation11], %s549
      %s552 = sshll.u32 [#allocation10], 4
      %s553 = int_to_ptr.vmem [resolvable:$true] %s552
      %555 = dma.vmem_to_hbm [thread:$0]  %s553, 128, %s7, [#allocation11]
    $region53: #{tpu_custom_call.1} parent=1 // pred_fallthru
      _
    // Predicated region
    $region54: #{tpu_custom_call.1} parent=1 // pred_check
      _
    $region55: #{tpu_custom_call.1} parent=1 // pred_check_branch
      %557 = sbr.rel (0) target = $region57
    $region56: #{tpu_custom_call.1} parent=1 // pred_region
      %558 = dma.done [#allocation5], 1024
    $region57: #{tpu_custom_call.1} parent=1 // pred_fallthru
      _
    // Predicated region
    $region58: #{tpu_custom_call.1} parent=1 // pred_check
      _
    $region59: #{tpu_custom_call.1} parent=1 // pred_check_branch
      %560 = sbr.rel (0) target = $region61
    $region60: #{tpu_custom_call.1} parent=1 // pred_region
      %561 = dma.done [#allocation11], 128
    $region61: #{tpu_custom_call.1} parent=1 // pred_fallthru
      _
    %562 = vsyncpa [#allocation4], 1
    %563 = vsyncpa [#allocation7], 1
    %564 = vsyncpa [#allocation5], 1
    %565 = vsyncpa [#allocation11], 1

</llo_original>
